<compile_context>
chip_gen: v6e
topology: v6e:2x2x1
jax: 0.10.0
libtpu: 0.0.40
codegen_flags: <defaults>
</compile_context>

<pallas_src>
import functools

import jax
import jax.numpy as jnp
import numpy as np
from jax.experimental import pallas as pl
from jax.experimental.pallas import tpu as pltpu


_QRANGES = {
    "quint8": (0.0, 255.0),
    "qint8": (-128.0, 127.0),
    "qint32": (float(-(2 ** 31)), float(2 ** 31 - 1)),
}


def _qcat_kernel(x_ref, o_ref, *, qmin, qmax, scale, zero_point, skip_requant):
    # Input block arrives in its native dtype; cast to f32 in vregs.
    x = x_ref[...].astype(jnp.float32)                        # (1, 1, S_blk, L)
    # torch.quantize_per_tensor(x, 1.0, 0, dtype): round-half-to-even + clamp.
    q1 = jnp.clip(jnp.round(x), qmin, qmax)
    if skip_requant:
        # scale == 1 and zero_point == 0: requantize + dequantize is identity.
        y = q1
    else:
        # quantized.cat requantize (true division, matching torch/numpy
        # bit-for-bit) followed by dequantize.
        q2 = jnp.clip(jnp.round(q1 / scale + zero_point), qmin, qmax)
        y = (q2 - zero_point) * scale
    o_ref[...] = y.astype(o_ref.dtype)


def _choose_tiling(M, N):
    """Pick (S, L, S_blk) with M == S * L exactly (no padding), L lane-dense."""
    if M % 128 == 0:
        L = next(c for c in (512, 256, 128) if M % c == 0)
        S = M // L
    else:
        # Ragged M: one full-width row per batch (full-dim exemption from the
        # (8,128) rule) -> still no wrapper pad / post-slice.
        # TODO(synk): for very large ragged M, tile the tail with masked stores
        # instead of a single full-slab block.
        L, S = M, 1
    # S_blk: a multiple-of-8 divisor of S (or the full dim) chosen so the grid
    # (N, S//S_blk, 4) has enough programs to feed both v7x TensorCores and the
    # DMA pipeline, while keeping the per-buffer VMEM footprint tiny.
    min_steps = 2 if N == 1 else 1
    s_blk = S
    for cand in (256, 128, 64, 32, 16, 8):
        if cand < S and S % cand == 0 and S // cand >= min_steps:
            s_blk = cand
            break
    return S, L, s_blk


def quantized_cat4(x, scale, zero_point, dtype="quint8", *, out_dtype=jnp.float32):
    """dequantize(quantized.cat([quantize(x, 1, 0)] * 4, dim=1, scale, zero_point)) for NCHW x."""
    assert x.ndim == 4, "expected NCHW input"
    qmin, qmax = _QRANGES[dtype]
    scale = float(scale)
    zero_point = float(int(zero_point))
    N, C, H, W = x.shape
    M = C * H * W

    S, L, S_blk = _choose_tiling(M, N)
    xf = x.reshape(N, 1, S, L)          # free contiguous reshape, native dtype

    # Innermost replica axis r: the input block index is independent of r, so
    # Pallas skips the input DMA for r = 1..3 (1R + 4W total HBM traffic).
    grid = (N, S // S_blk, 4)

    kernel = functools.partial(
        _qcat_kernel,
        qmin=qmin,
        qmax=qmax,
        scale=scale,
        zero_point=zero_point,
        skip_requant=(scale == 1.0 and zero_point == 0.0),
    )

    in_bytes = N * M * x.dtype.itemsize
    out_bytes = 4 * N * M * jnp.dtype(out_dtype).itemsize

    out = pl.pallas_call(
        kernel,
        out_shape=jax.ShapeDtypeStruct((N, 4, S, L), out_dtype),
        grid=grid,
        in_specs=[pl.BlockSpec((1, 1, S_blk, L), lambda n, s, r: (n, 0, s, 0))],
        out_specs=pl.BlockSpec((1, 1, S_blk, L), lambda n, s, r: (n, r, s, 0)),
        compiler_params=pltpu.CompilerParams(
            dimension_semantics=("parallel", "parallel", "arbitrary"),
        ),
        cost_estimate=pl.CostEstimate(
            flops=9 * 4 * N * M,
            transcendentals=0,
            bytes_accessed=in_bytes + out_bytes,
        ),
    )(xf)

    # (N, 4, S, L) == (N, 4, C*H*W) -> NCHW concat layout; contiguous reshape.
    return out.reshape(N, 4 * C, H, W)


def _reference(x, scale, zero_point, dtype="quint8"):
    qmin, qmax = _QRANGES[dtype]
    scale = float(scale)
    zp = float(int(zero_point))
    q1 = np.clip(np.round(np.asarray(x, dtype=np.float32)), qmin, qmax)
    q2 = np.clip(np.round(q1 / scale + zp), qmin, qmax)
    y = ((q2 - zp) * scale).astype(np.float32)
    return np.concatenate([y, y, y, y], axis=1)


if __name__ == "__main__":
    key = jax.random.PRNGKey(0)
    N, C, H, W = 2, 4, 16, 16
    x = jax.random.normal(key, (N, C, H, W), dtype=jnp.float32) * 30.0

    scale, zero_point, qdtype = 0.75, 7, "quint8"

    out = quantized_cat4(x, scale, zero_point, qdtype)
    out = jax.block_until_ready(out)

    ref = _reference(np.asarray(x), scale, zero_point, qdtype)
    assert out.shape == (N, 4 * C, H, W), out.shape
    np.testing.assert_allclose(np.asarray(out), ref, rtol=0, atol=1e-5)

    print("KERNEL_OK")
</pallas_src>

<mosaic_0001>
module attributes {stable_mosaic.version = 11 : i64} {
  func.func @_qcat_kernel(%arg0: i32, %arg1: i32, %arg2: i32, %arg3: memref<1x1x2x512xf32, #tpu.memory_space<vmem>>, %arg4: memref<1x1x2x512xf32, #tpu.memory_space<vmem>>) attributes {dimension_semantics = [#tpu.dimension_semantics<parallel>, #tpu.dimension_semantics<parallel>, #tpu.dimension_semantics<arbitrary>], iteration_bounds = array<i64: 2, 1, 4>, scalar_prefetch = 0 : i64, scratch_operands = 0 : i64, tpu.core_type = #tpu.core_type<tc>, window_params = [{transform_indices = @transform_0, window_bounds = array<i64: 1, 1, 2, 512>}, {transform_indices = @transform_1, window_bounds = array<i64: 1, 1, 2, 512>}]} {
    %c0 = arith.constant 0 : index
    %c0_0 = arith.constant 0 : index
    %c0_1 = arith.constant 0 : index
    %c0_2 = arith.constant 0 : index
    %0 = vector.load %arg3[%c0, %c0_0, %c0_1, %c0_2] : memref<1x1x2x512xf32, #tpu.memory_space<vmem>>, vector<1x1x2x512xf32>
    %1 = math.roundeven %0 : vector<1x1x2x512xf32>
    %cst = arith.constant 0.000000e+00 : f32
    %cst_3 = arith.constant 2.550000e+02 : f32
    %2 = vector.broadcast %cst : f32 to vector<1x1x2x512xf32>
    %3 = arith.maximumf %2, %1 : vector<1x1x2x512xf32>
    %4 = vector.broadcast %cst_3 : f32 to vector<1x1x2x512xf32>
    %5 = arith.minimumf %4, %3 : vector<1x1x2x512xf32>
    %cst_4 = arith.constant 7.500000e-01 : f32
    %6 = vector.broadcast %cst_4 : f32 to vector<1x1x2x512xf32>
    %7 = arith.divf %5, %6 : vector<1x1x2x512xf32>
    %cst_5 = arith.constant 7.000000e+00 : f32
    %8 = vector.broadcast %cst_5 : f32 to vector<1x1x2x512xf32>
    %9 = arith.addf %7, %8 : vector<1x1x2x512xf32>
    %10 = math.roundeven %9 : vector<1x1x2x512xf32>
    %cst_6 = arith.constant 0.000000e+00 : f32
    %cst_7 = arith.constant 2.550000e+02 : f32
    %11 = vector.broadcast %cst_6 : f32 to vector<1x1x2x512xf32>
    %12 = arith.maximumf %11, %10 : vector<1x1x2x512xf32>
    %13 = vector.broadcast %cst_7 : f32 to vector<1x1x2x512xf32>
    %14 = arith.minimumf %13, %12 : vector<1x1x2x512xf32>
    %cst_8 = arith.constant 7.000000e+00 : f32
    %15 = vector.broadcast %cst_8 : f32 to vector<1x1x2x512xf32>
    %16 = arith.subf %14, %15 : vector<1x1x2x512xf32>
    %cst_9 = arith.constant 7.500000e-01 : f32
    %17 = vector.broadcast %cst_9 : f32 to vector<1x1x2x512xf32>
    %18 = arith.mulf %16, %17 : vector<1x1x2x512xf32>
    %c0_10 = arith.constant 0 : index
    %c0_11 = arith.constant 0 : index
    %c0_12 = arith.constant 0 : index
    %c0_13 = arith.constant 0 : index
    %19 = vector.load %arg4[%c0_10, %c0_11, %c0_12, %c0_13] : memref<1x1x2x512xf32, #tpu.memory_space<vmem>>, vector<1x1x2x512xf32>
    tpu.vector_store %arg4[%c0_10, %c0_11, %c0_12, %c0_13], %18 {strides = array<i32>} : memref<1x1x2x512xf32, #tpu.memory_space<vmem>>, vector<1x1x2x512xf32>,
    return
  }
  func.func @transform_0(%arg0: i32, %arg1: i32, %arg2: i32) -> (i32, i32, i32, i32) {
    %c0_i32 = arith.constant 0 : i32
    %c0_i32_0 = arith.constant 0 : i32
    %c0_i32_1 = arith.constant 0 : i32
    return %arg0, %c0_i32, %arg1, %c0_i32_0 : i32, i32, i32, i32
  }
  func.func @transform_1(%arg0: i32, %arg1: i32, %arg2: i32) -> (i32, i32, i32, i32) {
    %c0_i32 = arith.constant 0 : i32
    %c0_i32_0 = arith.constant 0 : i32
    return %arg0, %arg2, %arg1, %c0_i32 : i32, i32, i32, i32
  }
}

</mosaic_0001>

<llo_original>
// kernel: tpu_custom_call.1
$region0: #{tpu_custom_call.1}
  #allocation0 [shape = 'u32[]', space=smem, size = 0x4, offset = 0x4, fixed_abs, tag = 'smem constant byte address 0x4 - core index']
  #allocation1 [shape = 'u32[144,128]{1,0:T(1,128)}', space=vmem, size = 0x12000, scoped, tag = 'internal scratch']
  %s0 = inlined_call_operand.hbm [shape: f32[2,1,2,512], index: 0, kind: input, shape index: {}]
  %s1 = inlined_call_operand.hbm [shape: f32[2,4,2,512], index: 1, kind: output, shape index: {}]
  %s2 = sld [smem:[#allocation0]]
  $region41: #{tpu_custom_call.1} parent=0
    _
  %s4 = ssub.s32 1, %s2
  %s5 = scalar_select 0, %s4, %s2
  $region1: #{tpu_custom_call.1} parent=0
    #allocation2 [shape = 'u8[8192]{0}', space=vmem, size = 0x2000, scoped, tag = 'input window, operand 0']
    #allocation3 [shape = 's32[2]{0}', space=sflag, size = 0x8, scoped, tag = 'scoped memory for tpu_custom_call.1']
    #allocation4 [shape = 's32[2]{0}', space=sflag, size = 0x8, scoped, tag = 'scoped memory for tpu_custom_call.1']
    #allocation5 [shape = 'u8[8192]{0}', space=vmem, size = 0x2000, scoped, tag = 'output window, operand 0']
    %6 = vsyncpa [#allocation3], 0
    %s7 = scalar_lea.sflag [#allocation3], 1
    %8 = vsyncpa %s7, 0
    %9 = vsyncpa [#allocation4], 0
    %s10 = scalar_lea.sflag [#allocation4], 1
    %11 = vsyncpa %s10, 0
    loop: start=0, step=1, limit=10
    $region2: #{tpu_custom_call.1} parent=1 // loop_pre_header
      _
    $region3: #{tpu_custom_call.1} parent=1 // loop_header
      %s13 = sphi 0, %s17
      %p14 = scmp.ge.s32.totalorder %s13, 10
      %s20 = sphi 0, %s39
      %s21 = sphi 0, %s35
      %s22 = sphi 0, %s31
      %s23 = sphi 0, %s20
      %s24 = sphi 0, %s21
      %s25 = sphi 0, %s22
      %s26 = sphi 0, %s23
      %s27 = sphi 0, %s24
      %s28 = sphi 0, %s25
      %s44 = sphi 0, %s46
      %s47 = sphi 0, %s44
      %s48 = sphi 0, %s47
      %s64 = sphi 0, %s48
      %s74 = sphi 0, %s76
      %s77 = sphi 0, %s74
      %s78 = sphi 0, %s77
      %s94 = sphi 0, %s78
    $region4: #{tpu_custom_call.1} parent=1 // loop_header_branch
      %16 = sbr.rel (%p14) target = $region8
    $region5: #{tpu_custom_call.1} parent=1 // loop_body
      %s18 = ssub.s32 %s13, 1
      %s19 = ssub.s32 %s13, 2
      %s29 = sadd.s32 1, %s22
      %p30 = scmp.ge.s32.totalorder %s29, 4
      %s31 = scalar_select %p30, 0, %s29
      %s32 = sadd.s32 1, %s21
      %s33 = scalar_select %p30, %s32, %s21
      %p34 = scmp.ge.s32.totalorder %s33, 1
      %s35 = scalar_select %p34, 0, %s33
      %s36 = sadd.s32 1, %s20
      %s37 = scalar_select %p34, %s36, %s20
      %p38 = scmp.ge.s32.totalorder %s37, 2
      %s39 = scalar_select %p38, 0, %s37
      %s40 = ssub.s32 %s20, %s39
      %s41 = ssub.s32 %s21, %s35
      %s42 = sor.u32 %s40, %s41
      %p43 = scmp.eq.s32.totalorder %s42, 0
      %s45 = sadd.s32 %s44, 1
      %s46 = scalar_select %p43, %s44, %s45
      %p49 = pneg %p43
      %p50 = scmp.eq.s32.totalorder %s13, 7
      %p51 = por %p49, %p50
      %p52 = scmp.ne.s32.totalorder %s44, %s47
      %p53 = scmp.eq.s32.totalorder %s13, 0
      %p54 = por %p52, %p53
      %p55 = scmp.ne.s32.totalorder %s44, %s47
      %p56 = scmp.eq.s32.totalorder %s18, 7
      %p57 = por %p55, %p56
      %p58 = scmp.ne.s32.totalorder %s47, %s48
      %p59 = scmp.eq.s32.totalorder %s18, 0
      %p60 = por %p58, %p59
      %p61 = scmp.ne.s32.totalorder %s47, %s48
      %p62 = scmp.eq.s32.totalorder %s19, 7
      %p63 = por %p61, %p62
      %p65 = scmp.ne.s32.totalorder %s48, %s64
      %p66 = scmp.eq.s32.totalorder %s19, 0
      %p67 = por %p65, %p66
      %s68 = ssub.s32 %s20, %s39
      %s69 = ssub.s32 %s22, %s31
      %s70 = sor.u32 %s68, %s69
      %s71 = ssub.s32 %s21, %s35
      %s72 = sor.u32 %s70, %s71
      %p73 = scmp.eq.s32.totalorder %s72, 0
      %s75 = sadd.s32 %s74, 1
      %s76 = scalar_select %p73, %s74, %s75
      %p79 = pneg %p73
      %p80 = scmp.eq.s32.totalorder %s13, 7
      %p81 = por %p79, %p80
      %p82 = scmp.ne.s32.totalorder %s74, %s77
      %p83 = scmp.eq.s32.totalorder %s13, 0
      %p84 = por %p82, %p83
      %p85 = scmp.ne.s32.totalorder %s74, %s77
      %p86 = scmp.eq.s32.totalorder %s18, 7
      %p87 = por %p85, %p86
      %p88 = scmp.ne.s32.totalorder %s77, %s78
      %p89 = scmp.eq.s32.totalorder %s18, 0
      %p90 = por %p88, %p89
      %p91 = scmp.ne.s32.totalorder %s77, %s78
      %p92 = scmp.eq.s32.totalorder %s19, 7
      %p93 = por %p91, %p92
      %p95 = scmp.ne.s32.totalorder %s78, %s94
      %p96 = scmp.eq.s32.totalorder %s19, 0
      %p97 = por %p95, %p96
      %p98 = scmp.le.s32.totalorder 1, %s13
      %p99 = scmp.lt.s32.totalorder %s13, 9
      %p100 = pnand %p98, %p99
      %p101 = pneg %p100
      // Predicated region
      $region9: #{tpu_custom_call.1} parent=5 // pred_check
        _
      $region10: #{tpu_custom_call.1} parent=5 // pred_check_branch
        %103 = sbr.rel (%p100) target = $region12
      $region11: #{tpu_custom_call.1} parent=5 // pred_region
        %s104 = ssub.s32 %s13, 1
      $region12: #{tpu_custom_call.1} parent=5 // pred_fallthru
        _
      %p105 = scmp.lt.s32.totalorder %s13, 8
      // Predicated region
      $region13: #{tpu_custom_call.1} parent=5 // pred_check
        %p106 = pneg %p105
      $region14: #{tpu_custom_call.1} parent=5 // pred_check_branch
        %108 = sbr.rel (%p106) target = $region16
      $region15: #{tpu_custom_call.1} parent=5 // pred_region
        // Predicated region
        $region17: #{tpu_custom_call.1} parent=15 // pred_check
          %p109 = pneg %p54
        $region18: #{tpu_custom_call.1} parent=15 // pred_check_branch
          %111 = sbr.rel (%p109) target = $region20
        $region19: #{tpu_custom_call.1} parent=15 // pred_region
          %s112 = sand.u32 %s44, 1
          %s113 = scalar_lea.sflag [#allocation3], %s112
          %s114 = sand.u32 %s44, 1
          %s115 = smul.addr %s114, 8
          %s116 = scalar_lea.vmem [#allocation2], %s115
          %s118 = ssub.s32 128, 128
          %119 = vsyncadd %s113, %s118
          %s120 = smul.addr %s21, 4
          %s121 = smul.addr %s20, 4
          %s122 = sadd.s32 %s120, %s121
          %s123 = smul.addr %s122, 32
          %s124 = scalar_lea.hbm %s0, %s123
          %s126 = sshll.u32 %s116, 4
          %s127 = int_to_ptr.vmem [resolvable:$true] %s126
          %129 = dma.hbm_to_vmem [thread:$0]  %s124, 128, %s127, %s113
        $region20: #{tpu_custom_call.1} parent=15 // pred_fallthru
          _
      $region16: #{tpu_custom_call.1} parent=5 // pred_fallthru
        _
      %p130 = scmp.le.s32.totalorder 1, %s13
      %p131 = scmp.lt.s32.totalorder %s13, 9
      %p132 = pnand %p130, %p131
      %p133 = pneg %p132
      // Predicated region
      $region21: #{tpu_custom_call.1} parent=5 // pred_check
        _
      $region22: #{tpu_custom_call.1} parent=5 // pred_check_branch
        %135 = sbr.rel (%p132) target = $region24
      $region23: #{tpu_custom_call.1} parent=5 // pred_region
        %s136 = ssub.s32 %s13, 1
        %s137 = sand.u32 %s47, 1
        %s138 = scalar_lea.sflag [#allocation3], %s137
        %s139 = sand.u32 %s47, 1
        %s140 = smul.addr %s139, 8
        %s141 = scalar_lea.vmem [#allocation2], %s140
        // Predicated region
        $region25: #{tpu_custom_call.1} parent=23 // pred_check
          %p142 = pneg %p60
        $region26: #{tpu_custom_call.1} parent=23 // pred_check_branch
          %144 = sbr.rel (%p142) target = $region28
        $region27: #{tpu_custom_call.1} parent=23 // pred_region
          %145 = dma.done %s138, 128
        $region28: #{tpu_custom_call.1} parent=23 // pred_fallthru
          _
        %s146 = sand.u32 %s47, 1
        %s147 = scalar_lea.sflag [#allocation3], %s146
        %s148 = sand.u32 %s47, 1
        %s149 = smul.addr %s148, 8
        %s150 = scalar_lea.vmem [#allocation2], %s149
        %p151 = pneg %p60
        %p152 = pneg %p57
        %p153 = pneg %p90
        %p154 = pneg %p87
        %s155 = sand.u32 %s77, 1
        %s156 = scalar_lea.sflag [#allocation4], %s155
        %s157 = sand.u32 %s77, 1
        %s158 = smul.addr %s157, 8
        %s159 = scalar_lea.vmem [#allocation5], %s158
        %v160 = vld [vmem:[%s141] sm:$0xff]
        %v161 = vround.ne.pseudo %v160
        %v162 = vmax.f32 %v161, 0.0
        %v163 = vmin.f32 %v162, 255.0
        %v164 = vrcp.pop 0.75
        %v165 = vmul.f32 %v163, %v164
        %v166 = vadd.f32 %v165, 7.0
        %v167 = vround.ne.pseudo %v166
        %v168 = vmax.f32 %v167, 0.0
        %v169 = vmin.f32 %v168, 255.0
        %v170 = vsub.f32 %v169, 7.0
        %v171 = vmul.f32 %v170, 0.75
        %172 = vst [vmem:[%s159] sm:$0xff] %v171
        %s173 = sand.u32 %s77, 1
        %s174 = scalar_lea.sflag [#allocation4], %s173
        %s175 = sand.u32 %s77, 1
        %s176 = smul.addr %s175, 8
        %s177 = scalar_lea.vmem [#allocation5], %s176
        // Predicated region
        $region29: #{tpu_custom_call.1} parent=23 // pred_check
          %p178 = pneg %p87
        $region30: #{tpu_custom_call.1} parent=23 // pred_check_branch
          %180 = sbr.rel (%p178) target = $region32
        $region31: #{tpu_custom_call.1} parent=23 // pred_region
          %s182 = ssub.s32 128, 128
          %183 = vsyncadd %s174, %s182
          %s184 = smul.addr %s24, 4
          %s185 = smul.addr %s25, 4
          %s186 = sadd.s32 %s184, %s185
          %s187 = smul.addr %s23, 16
          %s188 = sadd.s32 %s186, %s187
          %s189 = smul.addr %s188, 32
          %s190 = scalar_lea.hbm %s1, %s189
          %s192 = sshll.u32 %s177, 4
          %s193 = int_to_ptr.vmem [resolvable:$true] %s192
          %195 = dma.vmem_to_hbm [thread:$0]  %s193, 128, %s190, %s174
        $region32: #{tpu_custom_call.1} parent=23 // pred_fallthru
          _
      $region24: #{tpu_custom_call.1} parent=5 // pred_fallthru
        _
      %p196 = scmp.le.s32.totalorder 2, %s13
      // Predicated region
      $region33: #{tpu_custom_call.1} parent=5 // pred_check
        %p197 = pneg %p196
      $region34: #{tpu_custom_call.1} parent=5 // pred_check_branch
        %199 = sbr.rel (%p197) target = $region36
      $region35: #{tpu_custom_call.1} parent=5 // pred_region
        %s200 = ssub.s32 %s13, 2
        // Predicated region
        $region37: #{tpu_custom_call.1} parent=35 // pred_check
          %p201 = pneg %p93
        $region38: #{tpu_custom_call.1} parent=35 // pred_check_branch
          %203 = sbr.rel (%p201) target = $region40
        $region39: #{tpu_custom_call.1} parent=35 // pred_region
          %s204 = sand.u32 %s78, 1
          %s205 = scalar_lea.sflag [#allocation4], %s204
          %s206 = sand.u32 %s78, 1
          %s207 = smul.addr %s206, 8
          %s208 = scalar_lea.vmem [#allocation5], %s207
          %209 = dma.done %s205, 128
        $region40: #{tpu_custom_call.1} parent=35 // pred_fallthru
          _
      $region36: #{tpu_custom_call.1} parent=5 // pred_fallthru
        _
    $region6: #{tpu_custom_call.1} parent=1 // loop_footer
      %s17 = sadd.s32 1, %s13
    $region7: #{tpu_custom_call.1} parent=1 // loop_footer_branch
      %12 = sbr.rel target = $region3
    $region8: #{tpu_custom_call.1} parent=1 // loop_exit
      _
    %210 = vsyncpa [#allocation3], 1
    %s211 = scalar_lea.sflag [#allocation3], 1
    %212 = vsyncpa %s211, 1
    %213 = vsyncpa [#allocation4], 1
    %s214 = scalar_lea.sflag [#allocation4], 1
    %215 = vsyncpa %s214, 1

</llo_original>
